<compile_context>
chip_gen: v6e
topology: v6e:2x2x1
jax: 0.10.0
libtpu: 0.0.40
codegen_flags: <defaults>
</compile_context>

<pallas_src>
import functools

import jax
import jax.numpy as jnp
from jax import lax
from jax.experimental import pallas as pl
from jax.experimental.pallas import tpu as pltpu


def _round_up(v, m):
    return (v + m - 1) // m * m


def _detpos3d_kernel(x_ref, const_ref, o_ref, *, zhw, eps, inv_n, mode):
    """One grid step: `bb` samples, each a (z,h,w,c)-interleaved row of N=3*zhw."""
    x = x_ref[...]                       # (bb, N) interleaved (channel fastest)
    a = const_ref[0:1, :]                # folded range-norm + scale: pos = x*a + b
    b = const_ref[1:2, :]
    g = const_ref[2:3, :]                # LayerNorm gamma (interleaved order)
    bt = const_ref[3:4, :]               # LayerNorm beta  (interleaved order)

    pos = x * a + b

    # One-pass per-sample mean / biased variance (LayerNorm over everything but
    # batch).  pos is pre-normalized to ~[-1, 1]*scale so E[x^2]-E[x]^2 does not
    # cancel catastrophically; the clamp also guards padded rows of a partial
    # final block.
    s = jnp.sum(pos, axis=-1, keepdims=True)
    ss = jnp.sum(pos * pos, axis=-1, keepdims=True)
    mean = s * inv_n
    var = jnp.maximum(ss * inv_n - mean * mean, 0.0)
    inv_std = lax.rsqrt(var + eps)

    y = (pos - mean) * inv_std * g + bt  # (bb, N), still interleaved

    if mode == "gather":
        # In-kernel channel deinterleave (NDHWC -> NCDHW): constant lane
        # permutation, out lane d <- in lane 3*(d % zhw) + d // zhw.
        d = lax.broadcasted_iota(jnp.int32, y.shape, 1)
        src = (d % zhw) * 3 + d // zhw
        o_ref[...] = jnp.take_along_axis(y, src, axis=1)
    elif mode == "strided":
        # Same deinterleave as three stride-3 lane slices.
        for c in range(3):
            o_ref[:, c * zhw:(c + 1) * zhw] = y[:, c::3]
    else:
        # Fallback: emit interleaved rows; wrapper transposes with XLA.
        o_ref[...] = y


def _detpos3d_call(x2, const, *, zhw, mode, eps, block_rows):
    B, N = x2.shape

    # Block sizing (perf review): sublane-dense (multiple of 8) row blocks,
    # >= 2 grid steps when the batch is big enough (so v7x's two TensorCores
    # both get work), capped at `block_rows` rows per step.
    cap = max(8, block_rows)
    steps = 1 if B <= 8 else max(2, pl.cdiv(B, cap))
    bb = _round_up(pl.cdiv(B, steps), 8)
    bb = min(bb, B) if B < 8 else min(bb, _round_up(B, 8))
    grid = (pl.cdiv(B, bb),)

    kernel = functools.partial(_detpos3d_kernel, zhw=zhw, eps=eps,
                               inv_n=1.0 / N, mode=mode)

    row_spec = pl.BlockSpec((bb, N), lambda i: (i, 0))
    const_spec = pl.BlockSpec((4, N), lambda i: (0, 0))   # resident constants

    return pl.pallas_call(
        kernel,
        out_shape=jax.ShapeDtypeStruct((B, N), jnp.float32),
        grid_spec=pltpu.PrefetchScalarGridSpec(
            num_scalar_prefetch=0,
            grid=grid,
            in_specs=[row_spec, const_spec],
            out_specs=row_spec),
        compiler_params=pltpu.CompilerParams(
            dimension_semantics=("parallel",),
            vmem_limit_bytes=32 * 1024 * 1024),
    )(x2, const)


_MODE_CACHE = {}


def _pick_deinterleave_mode(zhw):
    """Feature-detect which in-kernel NDHWC->NCDHW deinterleave this Mosaic
    build supports (lane gather / stride-3 lane slice), validating the result
    numerically on a tiny probe.  Falls back to an XLA transpose otherwise."""
    if zhw in _MODE_CACHE:
        return _MODE_CACHE[zhw]

    n = 3 * zhw
    bp = 8
    kx, kc = jax.random.split(jax.random.PRNGKey(123))
    xp = jax.random.normal(kx, (bp, n), jnp.float32)
    cst = jax.random.normal(kc, (4, n), jnp.float32)

    pos = xp * cst[0] + cst[1]
    mean = jnp.mean(pos, axis=1, keepdims=True)
    var = jnp.mean((pos - mean) ** 2, axis=1, keepdims=True)
    yref = (pos - mean) / jnp.sqrt(var + 1e-5) * cst[2] + cst[3]
    want = jnp.transpose(yref.reshape(bp, zhw, 3), (0, 2, 1)).reshape(bp, n)

    picked = "xla"
    for mode in ("gather", "strided"):
        try:
            got = jax.block_until_ready(
                _detpos3d_call(xp, cst, zhw=zhw, mode=mode, eps=1e-5,
                               block_rows=512))
            if bool(jnp.allclose(got, want, atol=1e-3, rtol=1e-3)):
                picked = mode
                break
        except Exception:
            continue
    _MODE_CACHE[zhw] = picked
    return picked


def detector_positional_encoding_3d(x, coord_ranges, scale_factors, gamma, beta,
                                    *, eps=1e-5, block_rows=512,
                                    deinterleave="auto"):
    """x: (B, Z, H, W, 3) float32 -> (B, 3, Z, H, W) float32."""
    B, Z, H, W, C = x.shape
    assert C == 3
    zhw = Z * H * W
    N = 3 * zhw

    lo = coord_ranges[:, 0].astype(jnp.float32)
    hi = coord_ranges[:, 1].astype(jnp.float32)
    sc = scale_factors.astype(jnp.float32)
    # pos_c = (2*(x - lo)/(hi - lo) - 1) * scale  ==  x * a_c + b_c
    # NOTE: hi == lo is degenerate (div by zero), matching PyTorch's behavior.
    a3 = 2.0 * sc / (hi - lo)
    b3 = -(2.0 * lo / (hi - lo) + 1.0) * sc

    # Per-channel / per-position params in interleaved (z, h, w, c) order,
    # stacked into one resident constant block.
    a_vec = jnp.tile(a3, zhw)
    b_vec = jnp.tile(b3, zhw)
    g_vec = jnp.transpose(gamma.astype(jnp.float32), (1, 2, 3, 0)).reshape(N)
    bt_vec = jnp.transpose(beta.astype(jnp.float32), (1, 2, 3, 0)).reshape(N)
    const = jnp.stack([a_vec, b_vec, g_vec, bt_vec])          # (4, N)

    x2 = x.astype(jnp.float32).reshape(B, N)                   # free reshape

    mode = deinterleave
    if mode == "auto":
        mode = _pick_deinterleave_mode(zhw)

    out2 = _detpos3d_call(x2, const, zhw=zhw, mode=mode, eps=eps,
                          block_rows=block_rows)

    if mode in ("gather", "strided"):
        # Kernel already emitted channel-major rows -> only a free reshape left.
        return out2.reshape(B, 3, Z, H, W)
    # Fallback path: single output-side NDHWC -> NCDHW transpose in XLA.
    return jnp.transpose(out2.reshape(B, zhw, 3),
                         (0, 2, 1)).reshape(B, 3, Z, H, W)


def _reference(x, coord_ranges, scale_factors, gamma, beta, eps=1e-5):
    B, Z, H, W, _ = x.shape
    coords = []
    for i in range(3):
        c = x[..., i]
        cn = 2 * (c - coord_ranges[i, 0]) / (coord_ranges[i, 1] - coord_ranges[i, 0]) - 1
        coords.append((cn * scale_factors[i]).reshape(B, 1, Z, H, W))
    pos = jnp.concatenate(coords, axis=1)  # (B, 3, Z, H, W)
    mean = jnp.mean(pos, axis=(1, 2, 3, 4), keepdims=True)
    var = jnp.mean((pos - mean) ** 2, axis=(1, 2, 3, 4), keepdims=True)
    return (pos - mean) / jnp.sqrt(var + eps) * gamma[None] + beta[None]


if __name__ == "__main__":
    B, Z, H, W = 2, 2, 16, 16

    key = jax.random.PRNGKey(0)
    kx, ks, kg, kb = jax.random.split(key, 4)

    # Input coordinates roughly within the registered coord ranges.
    base = jax.random.uniform(kx, (B, Z, H, W, 3), dtype=jnp.float32)
    spans = jnp.array([4000.0, 4000.0, 2.0], dtype=jnp.float32)
    x = base * spans  # (B, Z, H, W, 3)

    # Deterministic parameter init (shapes from __init__):
    coord_ranges = jnp.array([[0.0, 4000.0], [0.0, 4000.0], [0.0, 2.0]],
                             dtype=jnp.float32)                       # buffer
    scale_factors = jnp.ones((3,), jnp.float32) + \
        0.1 * jax.random.normal(ks, (3,), jnp.float32)                # Parameter
    gamma = jnp.ones((3, Z, H, W), jnp.float32) + \
        0.05 * jax.random.normal(kg, (3, Z, H, W), jnp.float32)       # LN weight
    beta = 0.05 * jax.random.normal(kb, (3, Z, H, W), jnp.float32)    # LN bias

    out = detector_positional_encoding_3d(x, coord_ranges, scale_factors,
                                          gamma, beta)
    out = jax.block_until_ready(out)

    ref = _reference(x, coord_ranges, scale_factors, gamma, beta)
    assert out.shape == (B, 3, Z, H, W)
    assert jnp.allclose(out, ref, atol=1e-4, rtol=1e-4)

    print("KERNEL_OK")
</pallas_src>

<mosaic_0001>
module attributes {stable_mosaic.version = 11 : i64} {
  func.func @_detpos3d_kernel(%arg0: i32, %arg1: memref<2x1536xf32, #tpu.memory_space<vmem>>, %arg2: memref<4x1536xf32, #tpu.memory_space<vmem>>, %arg3: memref<2x1536xf32, #tpu.memory_space<vmem>>) attributes {dimension_semantics = [#tpu.dimension_semantics<parallel>], iteration_bounds = array<i64: 1>, scalar_prefetch = 0 : i64, scratch_operands = 0 : i64, tpu.core_type = #tpu.core_type<tc>, window_params = [{transform_indices = @transform_0, window_bounds = array<i64: 2, 1536>}, {pipeline_mode = #tpu.pipeline_mode<synchronous>, transform_indices = @transform_1, window_bounds = array<i64: 4, 1536>}, {transform_indices = @transform_2, window_bounds = array<i64: 2, 1536>}]} {
    %c0 = arith.constant 0 : index
    %c0_0 = arith.constant 0 : index
    %0 = vector.load %arg1[%c0, %c0_0] : memref<2x1536xf32, #tpu.memory_space<vmem>>, vector<2x1536xf32>
    %c0_1 = arith.constant 0 : index
    %c0_2 = arith.constant 0 : index
    %1 = vector.load %arg2[%c0_1, %c0_2] : memref<4x1536xf32, #tpu.memory_space<vmem>>, vector<1x1536xf32>
    %c1 = arith.constant 1 : index
    %c0_3 = arith.constant 0 : index
    %2 = vector.load %arg2[%c1, %c0_3] : memref<4x1536xf32, #tpu.memory_space<vmem>>, vector<1x1536xf32>
    %c2 = arith.constant 2 : index
    %c0_4 = arith.constant 0 : index
    %3 = vector.load %arg2[%c2, %c0_4] : memref<4x1536xf32, #tpu.memory_space<vmem>>, vector<1x1536xf32>
    %c3 = arith.constant 3 : index
    %c0_5 = arith.constant 0 : index
    %4 = vector.load %arg2[%c3, %c0_5] : memref<4x1536xf32, #tpu.memory_space<vmem>>, vector<1x1536xf32>
    %5 = vector.broadcast %1 : vector<1x1536xf32> to vector<2x1536xf32>
    %6 = arith.mulf %0, %5 : vector<2x1536xf32>
    %7 = vector.broadcast %2 : vector<1x1536xf32> to vector<2x1536xf32>
    %8 = arith.addf %6, %7 : vector<2x1536xf32>
    %cst = arith.constant dense<0.000000e+00> : vector<2xf32>
    %9 = vector.multi_reduction <add>, %8, %cst [1] : vector<2x1536xf32> to vector<2xf32>
    %10 = vector.shape_cast %9 : vector<2xf32> to vector<2x1xf32>
    %11 = arith.mulf %8, %8 : vector<2x1536xf32>
    %cst_6 = arith.constant dense<0.000000e+00> : vector<2xf32>
    %12 = vector.multi_reduction <add>, %11, %cst_6 [1] : vector<2x1536xf32> to vector<2xf32>
    %13 = vector.shape_cast %12 : vector<2xf32> to vector<2x1xf32>
    %cst_7 = arith.constant 6.51041686E-4 : f32
    %14 = vector.broadcast %cst_7 : f32 to vector<2x1xf32>
    %15 = arith.mulf %10, %14 : vector<2x1xf32>
    %cst_8 = arith.constant 6.51041686E-4 : f32
    %16 = vector.broadcast %cst_8 : f32 to vector<2x1xf32>
    %17 = arith.mulf %13, %16 : vector<2x1xf32>
    %18 = arith.mulf %15, %15 : vector<2x1xf32>
    %19 = arith.subf %17, %18 : vector<2x1xf32>
    %cst_9 = arith.constant 0.000000e+00 : f32
    %20 = vector.broadcast %cst_9 : f32 to vector<2x1xf32>
    %21 = arith.maximumf %19, %20 : vector<2x1xf32>
    %cst_10 = arith.constant 9.99999974E-6 : f32
    %22 = vector.broadcast %cst_10 : f32 to vector<2x1xf32>
    %23 = arith.addf %21, %22 : vector<2x1xf32>
    %24 = math.rsqrt %23 : vector<2x1xf32>
    %25 = vector.broadcast %15 : vector<2x1xf32> to vector<2x1536xf32>
    %26 = arith.subf %8, %25 : vector<2x1536xf32>
    %27 = vector.broadcast %24 : vector<2x1xf32> to vector<2x1536xf32>
    %28 = arith.mulf %26, %27 : vector<2x1536xf32>
    %29 = vector.broadcast %3 : vector<1x1536xf32> to vector<2x1536xf32>
    %30 = arith.mulf %28, %29 : vector<2x1536xf32>
    %31 = vector.broadcast %4 : vector<1x1536xf32> to vector<2x1536xf32>
    %32 = arith.addf %30, %31 : vector<2x1536xf32>
    %c0_11 = arith.constant 0 : index
    %c0_12 = arith.constant 0 : index
    %33 = vector.load %arg3[%c0_11, %c0_12] : memref<2x1536xf32, #tpu.memory_space<vmem>>, vector<2x1536xf32>
    tpu.vector_store %arg3[%c0_11, %c0_12], %32 {strides = array<i32>} : memref<2x1536xf32, #tpu.memory_space<vmem>>, vector<2x1536xf32>,
    return
  }
  func.func @transform_0(%arg0: i32) -> (i32, i32) {
    %c0_i32 = arith.constant 0 : i32
    %c0_i32_0 = arith.constant 0 : i32
    return %arg0, %c0_i32 : i32, i32
  }
  func.func @transform_1(%arg0: i32) -> (i32, i32) {
    %c0_i32 = arith.constant 0 : i32
    %c0_i32_0 = arith.constant 0 : i32
    %c0_i32_1 = arith.constant 0 : i32
    return %c0_i32, %c0_i32_0 : i32, i32
  }
  func.func @transform_2(%arg0: i32) -> (i32, i32) {
    %c0_i32 = arith.constant 0 : i32
    %c0_i32_0 = arith.constant 0 : i32
    return %arg0, %c0_i32 : i32, i32
  }
}

</mosaic_0001>

<llo_original>
// kernel: tpu_custom_call.1
$region0: #{tpu_custom_call.1}
  #allocation0 [shape = 'u32[]', space=smem, size = 0x4, offset = 0x4, fixed_abs, tag = 'smem constant byte address 0x4 - core index']
  #allocation1 [shape = 'u32[144,128]{1,0:T(1,128)}', space=vmem, size = 0x12000, scoped, tag = 'internal scratch']
  %s0 = inlined_call_operand.hbm [shape: f32[2,1536], index: 0, kind: input, shape index: {}]
  %s1 = inlined_call_operand.hbm [shape: f32[4,1536], index: 1, kind: input, shape index: {}]
  %s2 = inlined_call_operand.hbm [shape: f32[2,1536], index: 2, kind: output, shape index: {}]
  %s3 = sld [smem:[#allocation0]]
  $region26: #{tpu_custom_call.1} parent=0
    _
  %s5 = ssub.s32 1, %s3
  %s6 = scalar_select 0, %s5, %s3
  $region1: #{tpu_custom_call.1} parent=0
    #allocation2 [shape = 'u8[12288]{0}', space=vmem, size = 0x3000, scoped, tag = 'input window, operand 0, single buffered']
    #allocation3 [shape = 's32[1]{0}', space=sflag, size = 0x4, scoped, tag = 'scoped memory for tpu_custom_call.1']
    #allocation4 [shape = 's32[1]{0}', space=sflag, size = 0x4, scoped, tag = 'scoped memory for tpu_custom_call.1']
    #allocation5 [shape = 'u8[24576]{0}', space=vmem, size = 0x6000, scoped, tag = 'input window, operand 1, single buffered']
    #allocation6 [shape = 's32[1]{0}', space=sflag, size = 0x4, scoped, tag = 'scoped memory for tpu_custom_call.1']
    #allocation7 [shape = 'u8[12288]{0}', space=vmem, size = 0x3000, scoped, tag = 'output window, operand 0, single buffered']
    %7 = vsyncpa [#allocation3], 0
    %8 = vsyncpa [#allocation6], 0
    %9 = vsyncpa [#allocation4], 0
    // Predicated region
    $region2: #{tpu_custom_call.1} parent=1 // pred_check
      _
    $region3: #{tpu_custom_call.1} parent=1 // pred_check_branch
      %11 = sbr.rel (0) target = $region5
    $region4: #{tpu_custom_call.1} parent=1 // pred_region
      %s13 = ssub.s32 384, 384
      %14 = vsyncadd [#allocation3], %s13
      %s16 = sshll.u32 [#allocation2], 4
      %s17 = int_to_ptr.vmem [resolvable:$true] %s16
      %19 = dma.hbm_to_vmem [thread:$0]  %s0, 384, %s17, [#allocation3]
    $region5: #{tpu_custom_call.1} parent=1 // pred_fallthru
      _
    // Predicated region
    $region6: #{tpu_custom_call.1} parent=1 // pred_check
      _
    $region7: #{tpu_custom_call.1} parent=1 // pred_check_branch
      %21 = sbr.rel (0) target = $region9
    $region8: #{tpu_custom_call.1} parent=1 // pred_region
      %s23 = ssub.s32 768, 768
      %24 = vsyncadd [#allocation6], %s23
      %s26 = sshll.u32 [#allocation5], 4
      %s27 = int_to_ptr.vmem [resolvable:$true] %s26
      %29 = dma.hbm_to_vmem [thread:$0]  %s1, 768, %s27, [#allocation6]
    $region9: #{tpu_custom_call.1} parent=1 // pred_fallthru
      _
    // Predicated region
    $region10: #{tpu_custom_call.1} parent=1 // pred_check
      _
    $region11: #{tpu_custom_call.1} parent=1 // pred_check_branch
      %31 = sbr.rel (0) target = $region13
    $region12: #{tpu_custom_call.1} parent=1 // pred_region
      %32 = dma.done [#allocation3], 384
    $region13: #{tpu_custom_call.1} parent=1 // pred_fallthru
      _
    // Predicated region
    $region14: #{tpu_custom_call.1} parent=1 // pred_check
      _
    $region15: #{tpu_custom_call.1} parent=1 // pred_check_branch
      %34 = sbr.rel (0) target = $region17
    $region16: #{tpu_custom_call.1} parent=1 // pred_region
      %35 = dma.done [#allocation6], 768
    $region17: #{tpu_custom_call.1} parent=1 // pred_fallthru
      _
    %v36 = vld [vmem:[#allocation2] sm:$0xff]
    %v37 = vld [vmem:[#allocation2 + $0x8] sm:$0xff]
    %v38 = vld [vmem:[#allocation2 + $0x10] sm:$0xff]
    %v39 = vld [vmem:[#allocation5] ss:$4 sm:$0xff]
    %s40 = scalar_lea.vmem [#allocation5], 32
    %v41 = vld [vmem:[%s40] ss:$4 sm:$0xf]
    %s42 = scalar_lea.vmem [#allocation5], 1
    %v43 = vld [vmem:[%s42] ss:$4 sm:$0xff]
    %s44 = scalar_lea.vmem [#allocation5], 33
    %v45 = vld [vmem:[%s44] ss:$4 sm:$0xf]
    %s46 = scalar_lea.vmem [#allocation5], 2
    %v47 = vld [vmem:[%s46] ss:$4 sm:$0xff]
    %s48 = scalar_lea.vmem [#allocation5], 34
    %v49 = vld [vmem:[%s48] ss:$4 sm:$0xf]
    %s50 = scalar_lea.vmem [#allocation5], 3
    %v51 = vld [vmem:[%s50] ss:$4 sm:$0xff]
    %s52 = scalar_lea.vmem [#allocation5], 35
    %v53 = vld [vmem:[%s52] ss:$4 sm:$0xf]
    %v56 = vlaneseq
    %v57 = vshrl.u32 %v56, 7
    %v58 = vsub.s32 0, %v57
    %v59 = vrot.slane %v39, %v58
    %v60 = vlaneseq
    %v61 = vshrl.u32 %v60, 7
    %v62 = vsub.s32 1, %v61
    %v63 = vrot.slane %v39, %v62
    %v64 = vlaneseq
    %v65 = vshrl.u32 %v64, 7
    %v66 = vsub.s32 2, %v65
    %v67 = vrot.slane %v39, %v66
    %v68 = vlaneseq
    %v69 = vshrl.u32 %v68, 7
    %v70 = vsub.s32 3, %v69
    %v71 = vrot.slane %v39, %v70
    %v72 = vlaneseq
    %v73 = vshrl.u32 %v72, 7
    %v74 = vsub.s32 4, %v73
    %v75 = vrot.slane %v39, %v74
    %v76 = vlaneseq
    %v77 = vshrl.u32 %v76, 7
    %v78 = vsub.s32 5, %v77
    %v79 = vrot.slane %v39, %v78
    %v80 = vlaneseq
    %v81 = vshrl.u32 %v80, 7
    %v82 = vsub.s32 6, %v81
    %v83 = vrot.slane %v39, %v82
    %v84 = vlaneseq
    %v85 = vshrl.u32 %v84, 7
    %v86 = vsub.s32 7, %v85
    %v87 = vrot.slane %v39, %v86
    %v88 = vlaneseq
    %v89 = vshrl.u32 %v88, 7
    %v90 = vsub.s32 0, %v89
    %v91 = vrot.slane %v41, %v90
    %v92 = vlaneseq
    %v93 = vshrl.u32 %v92, 7
    %v94 = vsub.s32 1, %v93
    %v95 = vrot.slane %v41, %v94
    %v96 = vlaneseq
    %v97 = vshrl.u32 %v96, 7
    %v98 = vsub.s32 2, %v97
    %v99 = vrot.slane %v41, %v98
    %v100 = vlaneseq
    %v101 = vshrl.u32 %v100, 7
    %v102 = vsub.s32 3, %v101
    %v103 = vrot.slane %v41, %v102
    %v104 = vcombine.low %v59, %v63
    %v105 = vcombine.low %v67, %v71
    %v107 = vunpack.c.l.s4 1983009808
    %v108 = vunpack.c.0.s8 %v107
    %v109 = vlaneseq
    %v110 = vshrl.u32 %v109, 7
    %v111 = vsub.s32 %v108, %v110
    %v112 = vrot.slane %v104, %v111
    %v114 = vunpack.c.l.s4 1983009808
    %v115 = vunpack.c.0.s8 %v114
    %v116 = vlaneseq
    %v117 = vshrl.u32 %v116, 7
    %v118 = vsub.s32 %v115, %v117
    %v119 = vrot.slane %v105, %v118
    %v120 = vcombine.low %v112, %v119
    %v121 = vcombine.low %v75, %v79
    %v122 = vcombine.low %v83, %v87
    %v124 = vunpack.c.l.s4 1983009808
    %v125 = vunpack.c.0.s8 %v124
    %v126 = vlaneseq
    %v127 = vshrl.u32 %v126, 7
    %v128 = vsub.s32 %v125, %v127
    %v129 = vrot.slane %v121, %v128
    %v131 = vunpack.c.l.s4 1983009808
    %v132 = vunpack.c.0.s8 %v131
    %v133 = vlaneseq
    %v134 = vshrl.u32 %v133, 7
    %v135 = vsub.s32 %v132, %v134
    %v136 = vrot.slane %v122, %v135
    %v137 = vcombine.low %v129, %v136
    %v138 = vcombine.low %v91, %v95
    %v139 = vcombine.low %v99, %v103
    %v141 = vunpack.c.l.s4 1983009808
    %v142 = vunpack.c.0.s8 %v141
    %v143 = vlaneseq
    %v144 = vshrl.u32 %v143, 7
    %v145 = vsub.s32 %v142, %v144
    %v146 = vrot.slane %v138, %v145
    %v148 = vunpack.c.l.s4 1983009808
    %v149 = vunpack.c.0.s8 %v148
    %v150 = vlaneseq
    %v151 = vshrl.u32 %v150, 7
    %v152 = vsub.s32 %v149, %v151
    %v153 = vrot.slane %v139, %v152
    %v154 = vcombine.low %v146, %v153
    %v158 = vmul.f32 %v36, %v120
    %v159 = vmul.f32 %v37, %v137
    %v160 = vmul.f32 %v38, %v154
    %v163 = vlaneseq
    %v164 = vshrl.u32 %v163, 7
    %v165 = vsub.s32 0, %v164
    %v166 = vrot.slane %v43, %v165
    %v167 = vlaneseq
    %v168 = vshrl.u32 %v167, 7
    %v169 = vsub.s32 1, %v168
    %v170 = vrot.slane %v43, %v169
    %v171 = vlaneseq
    %v172 = vshrl.u32 %v171, 7
    %v173 = vsub.s32 2, %v172
    %v174 = vrot.slane %v43, %v173
    %v175 = vlaneseq
    %v176 = vshrl.u32 %v175, 7
    %v177 = vsub.s32 3, %v176
    %v178 = vrot.slane %v43, %v177
    %v179 = vlaneseq
    %v180 = vshrl.u32 %v179, 7
    %v181 = vsub.s32 4, %v180
    %v182 = vrot.slane %v43, %v181
    %v183 = vlaneseq
    %v184 = vshrl.u32 %v183, 7
    %v185 = vsub.s32 5, %v184
    %v186 = vrot.slane %v43, %v185
    %v187 = vlaneseq
    %v188 = vshrl.u32 %v187, 7
    %v189 = vsub.s32 6, %v188
    %v190 = vrot.slane %v43, %v189
    %v191 = vlaneseq
    %v192 = vshrl.u32 %v191, 7
    %v193 = vsub.s32 7, %v192
    %v194 = vrot.slane %v43, %v193
    %v195 = vlaneseq
    %v196 = vshrl.u32 %v195, 7
    %v197 = vsub.s32 0, %v196
    %v198 = vrot.slane %v45, %v197
    %v199 = vlaneseq
    %v200 = vshrl.u32 %v199, 7
    %v201 = vsub.s32 1, %v200
    %v202 = vrot.slane %v45, %v201
    %v203 = vlaneseq
    %v204 = vshrl.u32 %v203, 7
    %v205 = vsub.s32 2, %v204
    %v206 = vrot.slane %v45, %v205
    %v207 = vlaneseq
    %v208 = vshrl.u32 %v207, 7
    %v209 = vsub.s32 3, %v208
    %v210 = vrot.slane %v45, %v209
    %v211 = vcombine.low %v166, %v170
    %v212 = vcombine.low %v174, %v178
    %v214 = vunpack.c.l.s4 1983009808
    %v215 = vunpack.c.0.s8 %v214
    %v216 = vlaneseq
    %v217 = vshrl.u32 %v216, 7
    %v218 = vsub.s32 %v215, %v217
    %v219 = vrot.slane %v211, %v218
    %v221 = vunpack.c.l.s4 1983009808
    %v222 = vunpack.c.0.s8 %v221
    %v223 = vlaneseq
    %v224 = vshrl.u32 %v223, 7
    %v225 = vsub.s32 %v222, %v224
    %v226 = vrot.slane %v212, %v225
    %v227 = vcombine.low %v219, %v226
    %v228 = vcombine.low %v182, %v186
    %v229 = vcombine.low %v190, %v194
    %v231 = vunpack.c.l.s4 1983009808
    %v232 = vunpack.c.0.s8 %v231
    %v233 = vlaneseq
    %v234 = vshrl.u32 %v233, 7
    %v235 = vsub.s32 %v232, %v234
    %v236 = vrot.slane %v228, %v235
    %v238 = vunpack.c.l.s4 1983009808
    %v239 = vunpack.c.0.s8 %v238
    %v240 = vlaneseq
    %v241 = vshrl.u32 %v240, 7
    %v242 = vsub.s32 %v239, %v241
    %v243 = vrot.slane %v229, %v242
    %v244 = vcombine.low %v236, %v243
    %v245 = vcombine.low %v198, %v202
    %v246 = vcombine.low %v206, %v210
    %v248 = vunpack.c.l.s4 1983009808
    %v249 = vunpack.c.0.s8 %v248
    %v250 = vlaneseq
    %v251 = vshrl.u32 %v250, 7
    %v252 = vsub.s32 %v249, %v251
    %v253 = vrot.slane %v245, %v252
    %v255 = vunpack.c.l.s4 1983009808
    %v256 = vunpack.c.0.s8 %v255
    %v257 = vlaneseq
    %v258 = vshrl.u32 %v257, 7
    %v259 = vsub.s32 %v256, %v258
    %v260 = vrot.slane %v246, %v259
    %v261 = vcombine.low %v253, %v260
    %v265 = vadd.f32 %v158, %v227
    %v266 = vadd.f32 %v159, %v244
    %v267 = vadd.f32 %v160, %v261
    %v271 = vcombine.high %v265, %v265
    %v273 = vunpack.c.l.s4 1983009808
    %v274 = vunpack.c.0.s8 %v273
    %v275 = vlaneseq
    %v276 = vshrl.u32 %v275, 7
    %v277 = vsub.s32 %v274, %v276
    %v278 = vrot.slane %v265, %v277
    %v280 = vunpack.c.l.s4 1983009808
    %v281 = vunpack.c.0.s8 %v280
    %v282 = vlaneseq
    %v283 = vshrl.u32 %v282, 7
    %v284 = vsub.s32 %v281, %v283
    %v285 = vrot.slane %v271, %v284
    %v286 = vcombine.high %v278, %v278
    %v287 = vcombine.high %v285, %v285
    %v288 = vcombine.high %v266, %v266
    %v290 = vunpack.c.l.s4 1983009808
    %v291 = vunpack.c.0.s8 %v290
    %v292 = vlaneseq
    %v293 = vshrl.u32 %v292, 7
    %v294 = vsub.s32 %v291, %v293
    %v295 = vrot.slane %v266, %v294
    %v297 = vunpack.c.l.s4 1983009808
    %v298 = vunpack.c.0.s8 %v297
    %v299 = vlaneseq
    %v300 = vshrl.u32 %v299, 7
    %v301 = vsub.s32 %v298, %v300
    %v302 = vrot.slane %v288, %v301
    %v303 = vcombine.high %v295, %v295
    %v304 = vcombine.high %v302, %v302
    %v305 = vcombine.high %v267, %v267
    %v307 = vunpack.c.l.s4 1983009808
    %v308 = vunpack.c.0.s8 %v307
    %v309 = vlaneseq
    %v310 = vshrl.u32 %v309, 7
    %v311 = vsub.s32 %v308, %v310
    %v312 = vrot.slane %v267, %v311
    %v314 = vunpack.c.l.s4 1983009808
    %v315 = vunpack.c.0.s8 %v314
    %v316 = vlaneseq
    %v317 = vshrl.u32 %v316, 7
    %v318 = vsub.s32 %v315, %v317
    %v319 = vrot.slane %v305, %v318
    %v320 = vcombine.high %v312, %v312
    %v321 = vcombine.high %v319, %v319
    %vm334 = vcmask 1041408
    %v335 = vsel %vm334, %v278, 0.0
    %v336 = vsel %vm334, %v286, 0.0
    %v337 = vadd.f32 %v335, %v336
    %v338 = vsel %vm334, %v285, 0.0
    %v339 = vadd.f32 %v337, %v338
    %v340 = vsel %vm334, %v287, 0.0
    %v341 = vadd.f32 %v339, %v340
    %v342 = vsel %vm334, %v295, 0.0
    %v343 = vadd.f32 %v341, %v342
    %v344 = vsel %vm334, %v303, 0.0
    %v345 = vadd.f32 %v343, %v344
    %v346 = vsel %vm334, %v302, 0.0
    %v347 = vadd.f32 %v345, %v346
    %v348 = vsel %vm334, %v304, 0.0
    %v349 = vadd.f32 %v347, %v348
    %v350 = vsel %vm334, %v312, 0.0
    %v351 = vadd.f32 %v349, %v350
    %v352 = vsel %vm334, %v320, 0.0
    %v353 = vadd.f32 %v351, %v352
    %v354 = vsel %vm334, %v319, 0.0
    %v355 = vadd.f32 %v353, %v354
    %v356 = vsel %vm334, %v321, 0.0
    %v357 = vadd.f32 %v355, %v356
    %358 = vadd.xlane.f32.xlu0 %v357
    %v359 = vpop.xlane.xlu0 %358
    %v360 = vmul.f32 %v265, %v265
    %v361 = vmul.f32 %v266, %v266
    %v362 = vmul.f32 %v267, %v267
    %v366 = vcombine.high %v360, %v360
    %v368 = vunpack.c.l.s4 1983009808
    %v369 = vunpack.c.0.s8 %v368
    %v370 = vlaneseq
    %v371 = vshrl.u32 %v370, 7
    %v372 = vsub.s32 %v369, %v371
    %v373 = vrot.slane %v360, %v372
    %v375 = vunpack.c.l.s4 1983009808
    %v376 = vunpack.c.0.s8 %v375
    %v377 = vlaneseq
    %v378 = vshrl.u32 %v377, 7
    %v379 = vsub.s32 %v376, %v378
    %v380 = vrot.slane %v366, %v379
    %v381 = vcombine.high %v373, %v373
    %v382 = vcombine.high %v380, %v380
    %v383 = vcombine.high %v361, %v361
    %v385 = vunpack.c.l.s4 1983009808
    %v386 = vunpack.c.0.s8 %v385
    %v387 = vlaneseq
    %v388 = vshrl.u32 %v387, 7
    %v389 = vsub.s32 %v386, %v388
    %v390 = vrot.slane %v361, %v389
    %v392 = vunpack.c.l.s4 1983009808
    %v393 = vunpack.c.0.s8 %v392
    %v394 = vlaneseq
    %v395 = vshrl.u32 %v394, 7
    %v396 = vsub.s32 %v393, %v395
    %v397 = vrot.slane %v383, %v396
    %v398 = vcombine.high %v390, %v390
    %v399 = vcombine.high %v397, %v397
    %v400 = vcombine.high %v362, %v362
    %v402 = vunpack.c.l.s4 1983009808
    %v403 = vunpack.c.0.s8 %v402
    %v404 = vlaneseq
    %v405 = vshrl.u32 %v404, 7
    %v406 = vsub.s32 %v403, %v405
    %v407 = vrot.slane %v362, %v406
    %v409 = vunpack.c.l.s4 1983009808
    %v410 = vunpack.c.0.s8 %v409
    %v411 = vlaneseq
    %v412 = vshrl.u32 %v411, 7
    %v413 = vsub.s32 %v410, %v412
    %v414 = vrot.slane %v400, %v413
    %v415 = vcombine.high %v407, %v407
    %v416 = vcombine.high %v414, %v414
    %v429 = vsel %vm334, %v373, 0.0
    %v430 = vsel %vm334, %v381, 0.0
    %v431 = vadd.f32 %v429, %v430
    %v432 = vsel %vm334, %v380, 0.0
    %v433 = vadd.f32 %v431, %v432
    %v434 = vsel %vm334, %v382, 0.0
    %v435 = vadd.f32 %v433, %v434
    %v436 = vsel %vm334, %v390, 0.0
    %v437 = vadd.f32 %v435, %v436
    %v438 = vsel %vm334, %v398, 0.0
    %v439 = vadd.f32 %v437, %v438
    %v440 = vsel %vm334, %v397, 0.0
    %v441 = vadd.f32 %v439, %v440
    %v442 = vsel %vm334, %v399, 0.0
    %v443 = vadd.f32 %v441, %v442
    %v444 = vsel %vm334, %v407, 0.0
    %v445 = vadd.f32 %v443, %v444
    %v446 = vsel %vm334, %v415, 0.0
    %v447 = vadd.f32 %v445, %v446
    %v448 = vsel %vm334, %v414, 0.0
    %v449 = vadd.f32 %v447, %v448
    %v450 = vsel %vm334, %v416, 0.0
    %v451 = vadd.f32 %v449, %v450
    %452 = vadd.xlane.f32.xlu0 %v451
    %v453 = vpop.xlane.xlu0 %452
    %v454 = vmul.f32 %v359, 0.0006510417
    %v455 = vmul.f32 %v453, 0.0006510417
    %v456 = vmul.f32 %v454, %v454
    %v457 = vsub.f32 %v455, %v456
    %v458 = vmax.f32 %v457, 0.0
    %v459 = vadd.f32 %v458, 1e-05
    %v460 = vrsqrt.pop %v459
    %v463 = vunpack.c.l.s4 269488144
    %v464 = vunpack.c.0.s8 %v463
    %v465 = vlaneseq
    %v466 = vshrl.u32 %v465, 7
    %v467 = vsub.s32 %v464, %v466
    %v468 = vrot.slane %v454, %v467
    %v470 = vsub.f32 %v265, %v468
    %v471 = vsub.f32 %v266, %v468
    %v472 = vsub.f32 %v267, %v468
    %v475 = vunpack.c.l.s4 269488144
    %v476 = vunpack.c.0.s8 %v475
    %v477 = vlaneseq
    %v478 = vshrl.u32 %v477, 7
    %v479 = vsub.s32 %v476, %v478
    %v480 = vrot.slane %v460, %v479
    %v482 = vmul.f32 %v470, %v480
    %v483 = vmul.f32 %v471, %v480
    %v484 = vmul.f32 %v472, %v480
    %v487 = vlaneseq
    %v488 = vshrl.u32 %v487, 7
    %v489 = vsub.s32 0, %v488
    %v490 = vrot.slane %v47, %v489
    %v491 = vlaneseq
    %v492 = vshrl.u32 %v491, 7
    %v493 = vsub.s32 1, %v492
    %v494 = vrot.slane %v47, %v493
    %v495 = vlaneseq
    %v496 = vshrl.u32 %v495, 7
    %v497 = vsub.s32 2, %v496
    %v498 = vrot.slane %v47, %v497
    %v499 = vlaneseq
    %v500 = vshrl.u32 %v499, 7
    %v501 = vsub.s32 3, %v500
    %v502 = vrot.slane %v47, %v501
    %v503 = vlaneseq
    %v504 = vshrl.u32 %v503, 7
    %v505 = vsub.s32 4, %v504
    %v506 = vrot.slane %v47, %v505
    %v507 = vlaneseq
    %v508 = vshrl.u32 %v507, 7
    %v509 = vsub.s32 5, %v508
    %v510 = vrot.slane %v47, %v509
    %v511 = vlaneseq
    %v512 = vshrl.u32 %v511, 7
    %v513 = vsub.s32 6, %v512
    %v514 = vrot.slane %v47, %v513
    %v515 = vlaneseq
    %v516 = vshrl.u32 %v515, 7
    %v517 = vsub.s32 7, %v516
    %v518 = vrot.slane %v47, %v517
    %v519 = vlaneseq
    %v520 = vshrl.u32 %v519, 7
    %v521 = vsub.s32 0, %v520
    %v522 = vrot.slane %v49, %v521
    %v523 = vlaneseq
    %v524 = vshrl.u32 %v523, 7
    %v525 = vsub.s32 1, %v524
    %v526 = vrot.slane %v49, %v525
    %v527 = vlaneseq
    %v528 = vshrl.u32 %v527, 7
    %v529 = vsub.s32 2, %v528
    %v530 = vrot.slane %v49, %v529
    %v531 = vlaneseq
    %v532 = vshrl.u32 %v531, 7
    %v533 = vsub.s32 3, %v532
    %v534 = vrot.slane %v49, %v533
    %v535 = vcombine.low %v490, %v494
    %v536 = vcombine.low %v498, %v502
    %v538 = vunpack.c.l.s4 1983009808
    %v539 = vunpack.c.0.s8 %v538
    %v540 = vlaneseq
    %v541 = vshrl.u32 %v540, 7
    %v542 = vsub.s32 %v539, %v541
    %v543 = vrot.slane %v535, %v542
    %v545 = vunpack.c.l.s4 1983009808
    %v546 = vunpack.c.0.s8 %v545
    %v547 = vlaneseq
    %v548 = vshrl.u32 %v547, 7
    %v549 = vsub.s32 %v546, %v548
    %v550 = vrot.slane %v536, %v549
    %v551 = vcombine.low %v543, %v550
    %v552 = vcombine.low %v506, %v510
    %v553 = vcombine.low %v514, %v518
    %v555 = vunpack.c.l.s4 1983009808
    %v556 = vunpack.c.0.s8 %v555
    %v557 = vlaneseq
    %v558 = vshrl.u32 %v557, 7
    %v559 = vsub.s32 %v556, %v558
    %v560 = vrot.slane %v552, %v559
    %v562 = vunpack.c.l.s4 1983009808
    %v563 = vunpack.c.0.s8 %v562
    %v564 = vlaneseq
    %v565 = vshrl.u32 %v564, 7
    %v566 = vsub.s32 %v563, %v565
    %v567 = vrot.slane %v553, %v566
    %v568 = vcombine.low %v560, %v567
    %v569 = vcombine.low %v522, %v526
    %v570 = vcombine.low %v530, %v534
    %v572 = vunpack.c.l.s4 1983009808
    %v573 = vunpack.c.0.s8 %v572
    %v574 = vlaneseq
    %v575 = vshrl.u32 %v574, 7
    %v576 = vsub.s32 %v573, %v575
    %v577 = vrot.slane %v569, %v576
    %v579 = vunpack.c.l.s4 1983009808
    %v580 = vunpack.c.0.s8 %v579
    %v581 = vlaneseq
    %v582 = vshrl.u32 %v581, 7
    %v583 = vsub.s32 %v580, %v582
    %v584 = vrot.slane %v570, %v583
    %v585 = vcombine.low %v577, %v584
    %v589 = vmul.f32 %v482, %v551
    %v590 = vmul.f32 %v483, %v568
    %v591 = vmul.f32 %v484, %v585
    %v594 = vlaneseq
    %v595 = vshrl.u32 %v594, 7
    %v596 = vsub.s32 0, %v595
    %v597 = vrot.slane %v51, %v596
    %v598 = vlaneseq
    %v599 = vshrl.u32 %v598, 7
    %v600 = vsub.s32 1, %v599
    %v601 = vrot.slane %v51, %v600
    %v602 = vlaneseq
    %v603 = vshrl.u32 %v602, 7
    %v604 = vsub.s32 2, %v603
    %v605 = vrot.slane %v51, %v604
    %v606 = vlaneseq
    %v607 = vshrl.u32 %v606, 7
    %v608 = vsub.s32 3, %v607
    %v609 = vrot.slane %v51, %v608
    %v610 = vlaneseq
    %v611 = vshrl.u32 %v610, 7
    %v612 = vsub.s32 4, %v611
    %v613 = vrot.slane %v51, %v612
    %v614 = vlaneseq
    %v615 = vshrl.u32 %v614, 7
    %v616 = vsub.s32 5, %v615
    %v617 = vrot.slane %v51, %v616
    %v618 = vlaneseq
    %v619 = vshrl.u32 %v618, 7
    %v620 = vsub.s32 6, %v619
    %v621 = vrot.slane %v51, %v620
    %v622 = vlaneseq
    %v623 = vshrl.u32 %v622, 7
    %v624 = vsub.s32 7, %v623
    %v625 = vrot.slane %v51, %v624
    %v626 = vlaneseq
    %v627 = vshrl.u32 %v626, 7
    %v628 = vsub.s32 0, %v627
    %v629 = vrot.slane %v53, %v628
    %v630 = vlaneseq
    %v631 = vshrl.u32 %v630, 7
    %v632 = vsub.s32 1, %v631
    %v633 = vrot.slane %v53, %v632
    %v634 = vlaneseq
    %v635 = vshrl.u32 %v634, 7
    %v636 = vsub.s32 2, %v635
    %v637 = vrot.slane %v53, %v636
    %v638 = vlaneseq
    %v639 = vshrl.u32 %v638, 7
    %v640 = vsub.s32 3, %v639
    %v641 = vrot.slane %v53, %v640
    %v642 = vcombine.low %v597, %v601
    %v643 = vcombine.low %v605, %v609
    %v645 = vunpack.c.l.s4 1983009808
    %v646 = vunpack.c.0.s8 %v645
    %v647 = vlaneseq
    %v648 = vshrl.u32 %v647, 7
    %v649 = vsub.s32 %v646, %v648
    %v650 = vrot.slane %v642, %v649
    %v652 = vunpack.c.l.s4 1983009808
    %v653 = vunpack.c.0.s8 %v652
    %v654 = vlaneseq
    %v655 = vshrl.u32 %v654, 7
    %v656 = vsub.s32 %v653, %v655
    %v657 = vrot.slane %v643, %v656
    %v658 = vcombine.low %v650, %v657
    %v659 = vcombine.low %v613, %v617
    %v660 = vcombine.low %v621, %v625
    %v662 = vunpack.c.l.s4 1983009808
    %v663 = vunpack.c.0.s8 %v662
    %v664 = vlaneseq
    %v665 = vshrl.u32 %v664, 7
    %v666 = vsub.s32 %v663, %v665
    %v667 = vrot.slane %v659, %v666
    %v669 = vunpack.c.l.s4 1983009808
    %v670 = vunpack.c.0.s8 %v669
    %v671 = vlaneseq
    %v672 = vshrl.u32 %v671, 7
    %v673 = vsub.s32 %v670, %v672
    %v674 = vrot.slane %v660, %v673
    %v675 = vcombine.low %v667, %v674
    %v676 = vcombine.low %v629, %v633
    %v677 = vcombine.low %v637, %v641
    %v679 = vunpack.c.l.s4 1983009808
    %v680 = vunpack.c.0.s8 %v679
    %v681 = vlaneseq
    %v682 = vshrl.u32 %v681, 7
    %v683 = vsub.s32 %v680, %v682
    %v684 = vrot.slane %v676, %v683
    %v686 = vunpack.c.l.s4 1983009808
    %v687 = vunpack.c.0.s8 %v686
    %v688 = vlaneseq
    %v689 = vshrl.u32 %v688, 7
    %v690 = vsub.s32 %v687, %v689
    %v691 = vrot.slane %v677, %v690
    %v692 = vcombine.low %v684, %v691
    %v696 = vadd.f32 %v589, %v658
    %v697 = vadd.f32 %v590, %v675
    %v698 = vadd.f32 %v591, %v692
    %699 = vst [vmem:[#allocation7] sm:$0xff] %v696
    %700 = vst [vmem:[#allocation7 + $0x8] sm:$0xff] %v697
    %701 = vst [vmem:[#allocation7 + $0x10] sm:$0xff] %v698
    // Predicated region
    $region18: #{tpu_custom_call.1} parent=1 // pred_check
      _
    $region19: #{tpu_custom_call.1} parent=1 // pred_check_branch
      %703 = sbr.rel (0) target = $region21
    $region20: #{tpu_custom_call.1} parent=1 // pred_region
      %s705 = ssub.s32 384, 384
      %706 = vsyncadd [#allocation4], %s705
      %s708 = sshll.u32 [#allocation7], 4
      %s709 = int_to_ptr.vmem [resolvable:$true] %s708
      %711 = dma.vmem_to_hbm [thread:$0]  %s709, 384, %s2, [#allocation4]
    $region21: #{tpu_custom_call.1} parent=1 // pred_fallthru
      _
    // Predicated region
    $region22: #{tpu_custom_call.1} parent=1 // pred_check
      _
    $region23: #{tpu_custom_call.1} parent=1 // pred_check_branch
      %713 = sbr.rel (0) target = $region25
    $region24: #{tpu_custom_call.1} parent=1 // pred_region
      %714 = dma.done [#allocation4], 384
    $region25: #{tpu_custom_call.1} parent=1 // pred_fallthru
      _
    %715 = vsyncpa [#allocation3], 1
    %716 = vsyncpa [#allocation6], 1
    %717 = vsyncpa [#allocation4], 1

</llo_original>
